<compile_context>
chip_gen: v7x
topology: tpu7x:2x2x1
jax: 0.10.0
libtpu: 0.0.40
codegen_flags: <defaults>
</compile_context>

<pallas_src>
import functools

import jax
import jax.numpy as jnp
from jax.experimental import pallas as pl
from jax.experimental.pallas import tpu as pltpu


def _round_up(a, b):
    return -(-a // b) * b


def _vnl_kernel(uu_ref, vv_ref, dgt_ref, dpr_ref, loss_ref, *,
                delta_cos, delta_z, delta_diff):
    """Per-group VNL loss with validity fused in as a -1.0 sentinel.

    uu_ref, vv_ref   : (3, SB, 128)     (u-u0)/fx, (v-v0)/fy at points 1..3
                       (batch-invariant; focal scaling pre-hoisted in glue)
    dgt_ref, dpr_ref : (B, 3, SB, 128)  gt / pred depth at points 1..3
    loss_ref         : (B, SB, 128)     loss if the group is valid, else -1.0
    """
    uu = uu_ref[...]
    vv = vv_ref[...]
    dgt = dgt_ref[...]
    dpr = dpr_ref[...]

    gx, gy, gz = [], [], []
    px, py, pz = [], [], []
    for i in range(3):
        us = uu[i]            # (SB, 128) -- shared (broadcast) across batch
        vs = vv[i]
        dg = dgt[:, i]        # (B, SB, 128)
        dp = dpr[:, i]
        adg = jnp.abs(dg)
        adp = jnp.abs(dp)
        # transfer_xyz: x = (u-u0)*|d|/fx, y = (v-v0)*|d|/fy, z = d
        gx.append(us * adg)
        gy.append(vs * adg)
        gz.append(dg)
        px.append(us * adp)
        py.append(vs * adp)
        pz.append(dp)

    # diff vectors d0 = P2-P1, d1 = P3-P1, d2 = P3-P2 on the gt groups
    dxs = [gx[1] - gx[0], gx[2] - gx[0], gx[2] - gx[1]]
    dys = [gy[1] - gy[0], gy[2] - gy[0], gy[2] - gy[1]]
    dzs = [gz[1] - gz[0], gz[2] - gz[0], gz[2] - gz[1]]
    # Per-component squares computed once; reused for the norms AND the
    # abs-free proximity mask (saves 9 abs vreg-ops on the binding VALU slot).
    dx2 = [v * v for v in dxs]
    dy2 = [v * v for v in dys]
    dz2 = [v * v for v in dzs]
    n2 = [dx2[i] + dy2[i] + dz2[i] for i in range(3)]

    # Cosine filter, symmetric squared form (no sqrt / divide).
    # Original: over the 3x3 Gram matrix of diff vectors, count entries with
    # |e_ij/(n_i n_j + 1e-8)| > delta_cos, ignore if count > 3.  The diagonal
    # fires for every non-degenerate diff vector and each off-diagonal pair
    # counts twice, so the rule reduces to "any off-diagonal |cos| > delta_cos".
    # Divergences only arise when >= 2 diff vectors are near-zero (duplicate
    # sampled points); those groups have all components < delta_diff so the
    # proximity mask below ignores them in BOTH formulations.
    c2 = delta_cos * delta_cos
    mask_cos = None
    for (i, j) in ((0, 1), (0, 2), (1, 2)):
        e = dxs[i] * dxs[j] + dys[i] * dys[j] + dzs[i] * dzs[j]
        h = e * e > c2 * (n2[i] * n2[j])
        mask_cos = h if mask_cos is None else (mask_cos | h)

    dd2 = delta_diff * delta_diff
    mask_pad = (gz[0] > delta_z) & (gz[1] > delta_z) & (gz[2] > delta_z)
    mask_x = (dx2[0] < dd2) | (dx2[1] < dd2) | (dx2[2] < dd2)
    mask_y = (dy2[0] < dd2) | (dy2[1] < dd2) | (dy2[2] < dd2)
    mask_z = (dz2[0] < dd2) | (dz2[1] < dd2) | (dz2[2] < dd2)
    mask = mask_pad & jnp.logical_not((mask_x & mask_y & mask_z) | mask_cos)

    # PyTorch quirk: pw_groups_pred[pw_groups_pred[:,:,2,:] == 0] = 1e-4.
    # The point-axis condition (pred z of point k == 0) indexes the COORD axis,
    # so coordinate k of ALL three predicted points is overwritten.
    m0 = pz[0] == 0.0
    m1 = pz[1] == 0.0
    m2 = pz[2] == 0.0
    px = [jnp.where(m0, 0.0001, v) for v in px]
    py = [jnp.where(m1, 0.0001, v) for v in py]
    pz = [jnp.where(m2, 0.0001, v) for v in pz]

    # virtual normals: cross(P2 - P1, P3 - P1)
    gnx = dys[0] * dzs[1] - dzs[0] * dys[1]
    gny = dzs[0] * dxs[1] - dxs[0] * dzs[1]
    gnz = dxs[0] * dys[1] - dys[0] * dxs[1]

    pax = px[1] - px[0]; pay = py[1] - py[0]; paz = pz[1] - pz[0]
    pbx = px[2] - px[0]; pby = py[2] - py[0]; pbz = pz[2] - pz[0]
    pnx = pay * pbz - paz * pby
    pny = paz * pbx - pax * pbz
    pnz = pax * pby - pay * pbx

    g2 = gnx * gnx + gny * gny + gnz * gnz
    p2 = pnx * pnx + pny * pny + pnz * pnz
    # Original: norm = sqrt(n2); norm += 0.01 if norm == 0; normal / norm.
    # When n2 == 0 all normal components are 0, so *100 still yields 0.
    # rsqrt issues on the EUP slot (VALU is the binding slot here).
    inv_g = jnp.where(g2 == 0.0, 100.0, jax.lax.rsqrt(g2))
    inv_p = jnp.where(p2 == 0.0, 100.0, jax.lax.rsqrt(p2))

    loss = (jnp.abs(gnx * inv_g - pnx * inv_p)
            + jnp.abs(gny * inv_g - pny * inv_p)
            + jnp.abs(gnz * inv_g - pnz * inv_p))

    # Fuse the validity mask into the output: invalid (incl. padded) lanes get
    # the -1.0 sentinel (every valid loss is >= 0), halving HBM writeback.
    loss_ref[...] = jnp.where(mask, loss, -1.0)


class VNLLossPallas:
    """Pallas-TPU implementation of VNL_Loss.forward."""

    LANES = 128
    SUBLANES = 8

    def __init__(self, focal_x, focal_y, input_size, delta_cos=0.867,
                 delta_z=0.0001, sample_ratio=0.15, max_tile_rows=512,
                 vmem_budget_bytes=20 * 1024 * 1024):
        self.fx = float(focal_x)
        self.fy = float(focal_y)
        self.H, self.W = int(input_size[0]), int(input_size[1])
        self.u0 = float(self.W // 2)
        self.v0 = float(self.H // 2)
        self.delta_cos = float(delta_cos)
        self.delta_z = float(delta_z)
        self.sample_ratio = float(sample_ratio)
        # max_tile_rows caps the block; vmem_budget_bytes models the per-tile
        # double-buffered I/O plus ~40 live (B,.,128) f32 temporaries so one
        # block stays comfortably inside v7x's 64 MiB physical VMEM as well as
        # the default scoped limits (an explicit vmem_limit_bytes is set too).
        self.max_tile_rows = int(max_tile_rows)
        self.vmem_budget_bytes = int(vmem_budget_bytes)

    # ---------------------------------------------------------------- glue --
    def _sample_indices(self, key):
        # select_index(): uniform-with-replacement point triples, shared across
        # the batch.  TODO(synk): reference uses numpy RNG; jax.random here.
        num = self.H * self.W
        n = int(num * self.sample_ratio)
        keys = jax.random.split(key, 3)
        idx = jnp.concatenate(
            [jax.random.randint(k, (n,), 0, num) for k in keys])   # (3n,)
        return idx, n

    def _tile_plan(self, n, B):
        LANES, SUB = self.LANES, self.SUBLANES
        rows = _round_up(max(-(-n // LANES), 1), SUB)
        # Bytes per sublane-row: double-buffered I/O (uu+vv: 6 planes,
        # dgt+dpr: 6B, out: B) + ~40 live (B,.,128) f32 temporaries.
        bytes_per_row = 2 * (6 + 7 * B) * LANES * 4 + 40 * B * LANES * 4
        cap = max(SUB, (self.vmem_budget_bytes // bytes_per_row) // SUB * SUB)
        max_rows = min(self.max_tile_rows, cap)
        num_tiles = -(-rows // max_rows)
        # Balanced split (no padding rows up to a multiple of max_rows) and at
        # least 2 grid steps when possible so v7x's 2nd TensorCore has work.
        if num_tiles < 2 and rows >= 2 * SUB:
            num_tiles = 2
        sb = _round_up(-(-rows // num_tiles), SUB)
        return num_tiles, sb, num_tiles * sb

    def _group_losses(self, pred_depth, gt_depth, key):
        B = gt_depth.shape[0]
        LANES = self.LANES
        HW = self.H * self.W
        idx, n = self._sample_indices(key)
        num_tiles, sb, s_rows = self._tile_plan(n, B)
        npad = s_rows * LANES
        pad = npad - n

        # ONE fused gather: gt and pred stacked along batch, all three point
        # sets concatenated -> a single jnp.take instead of six gathers.
        flat = jnp.concatenate(
            [gt_depth.reshape(B, HW), pred_depth.reshape(B, HW)],
            axis=0).astype(jnp.float32)                    # (2B, HW)
        gathered = jnp.take(flat, idx, axis=1)             # (2B, 3n)
        dgt = gathered[:B].reshape(B, 3, n)
        dpr = gathered[B:].reshape(B, 3, n)
        # TODO(synk): an in-kernel gather (scalar-prefetched indices over a
        # VMEM-resident depth tile) would avoid materializing these in HBM.

        # Batch-invariant image-plane offsets; focal scaling hoisted here so
        # the kernel never multiplies by 1/fx, 1/fy per batch element.
        uu = (((idx % self.W).astype(jnp.float32) - self.u0)
              * (1.0 / self.fx)).reshape(3, n)
        vv = (((idx // self.W).astype(jnp.float32) - self.v0)
              * (1.0 / self.fy)).reshape(3, n)

        # Pad the group axis -> lane-dense (S,128) repack.  Padded gt depth 0
        # fails mask_pad, so padded lanes come out as the -1.0 sentinel.
        dgt = jnp.pad(dgt, ((0, 0), (0, 0), (0, pad))).reshape(B, 3, s_rows, LANES)
        dpr = jnp.pad(dpr, ((0, 0), (0, 0), (0, pad))).reshape(B, 3, s_rows, LANES)
        uu = jnp.pad(uu, ((0, 0), (0, pad))).reshape(3, s_rows, LANES)
        vv = jnp.pad(vv, ((0, 0), (0, pad))).reshape(3, s_rows, LANES)

        kernel = functools.partial(
            _vnl_kernel, delta_cos=self.delta_cos, delta_z=self.delta_z,
            delta_diff=0.005)

        # Whole batch folded into each block (element-wise broadcast in the
        # kernel); single balanced "parallel" group-tile grid axis.
        return pl.pallas_call(
            kernel,
            out_shape=jax.ShapeDtypeStruct((B, s_rows, LANES), jnp.float32),
            grid_spec=pltpu.PrefetchScalarGridSpec(
                num_scalar_prefetch=0,
                grid=(num_tiles,),
                in_specs=[
                    pl.BlockSpec((3, sb, LANES), lambda t: (0, t, 0)),        # uu
                    pl.BlockSpec((3, sb, LANES), lambda t: (0, t, 0)),        # vv
                    pl.BlockSpec((B, 3, sb, LANES), lambda t: (0, 0, t, 0)),  # gt
                    pl.BlockSpec((B, 3, sb, LANES), lambda t: (0, 0, t, 0)),  # pred
                ],
                out_specs=pl.BlockSpec((B, sb, LANES), lambda t: (0, t, 0)),
            ),
            compiler_params=pltpu.CompilerParams(
                dimension_semantics=("parallel",),
                vmem_limit_bytes=32 * 1024 * 1024),
        )(uu, vv, dgt, dpr)

    # ----------------------------------------------------------- selection --
    @staticmethod
    def _masked_mean(loss_flat, valid):
        m = jnp.sum(valid.astype(jnp.float32))
        return jnp.sum(jnp.where(valid, loss_flat, 0.0)) / m

    @staticmethod
    def _trimmed_mean(loss_flat, valid):
        """Mean of valid losses after dropping the smallest m//4 — sort-free.

        Finds the exact (m//4)-th smallest valid loss by bisection on the f32
        bit pattern (monotone for non-negative floats), then removes the
        dropped mass from the running sum.  Ties at the threshold are all
        equal-valued, so this matches the positional sort-and-slice exactly.
        m == 0 yields 0/0 = NaN, matching torch.mean of an empty tensor.
        """
        m = jnp.sum(valid.astype(jnp.int32))
        total = jnp.sum(jnp.where(valid, loss_flat, 0.0))
        d = m // 4
        bits = jax.lax.bitcast_convert_type(loss_flat, jnp.int32)

        def body(_, lohi):
            lo, hi = lohi
            mid = lo + (hi - lo) // 2
            cnt = jnp.sum(jnp.where(valid & (bits <= mid), 1, 0))
            ok = cnt >= d
            return (jnp.where(ok, lo, mid + 1), jnp.where(ok, mid, hi))

        lo, _ = jax.lax.fori_loop(
            0, 31, body, (jnp.int32(0), jnp.int32(2 ** 31 - 1)))
        t = jax.lax.bitcast_convert_type(lo, jnp.float32)
        below = valid & (loss_flat < t)
        c_lt = jnp.sum(jnp.where(below, 1, 0))
        s_lt = jnp.sum(jnp.where(below, loss_flat, 0.0))
        dropped = s_lt + (d - c_lt).astype(jnp.float32) * t
        return (total - dropped) / (m - d).astype(jnp.float32)

    @staticmethod
    def _trimmed_mean_sort(loss_flat, valid):
        """Sort-based formulation (used only as a self-check reference)."""
        total = loss_flat.shape[0]
        m = jnp.sum(valid.astype(jnp.int32))
        sorted_loss = jnp.sort(loss_flat)        # invalid (-1.0) sort first
        keep_start = (total - m) + m // 4
        w = (jnp.arange(total) >= keep_start).astype(jnp.float32)
        return jnp.sum(sorted_loss * w) / jnp.sum(w)

    # -------------------------------------------------------------- forward --
    def __call__(self, pred_depth, gt_depth, key, select=True):
        loss3 = self._group_losses(pred_depth, gt_depth, key)
        loss_flat = loss3.reshape(-1)
        valid = loss_flat >= 0.0       # invalid / padded lanes carry -1.0
        if select:
            return self._trimmed_mean(loss_flat, valid)
        return self._masked_mean(loss_flat, valid)


if __name__ == "__main__":
    B, H, W = 2, 32, 32
    key = jax.random.PRNGKey(0)
    k_gt, k_pred, k_sample = jax.random.split(key, 3)
    gt_depth = jax.random.uniform(k_gt, (B, 1, H, W), jnp.float32, 0.5, 2.0)
    pred_depth = jax.random.uniform(k_pred, (B, 1, H, W), jnp.float32, 0.5, 2.0)

    vnl = VNLLossPallas(focal_x=32.0, focal_y=32.0, input_size=(H, W))
    out_sel = vnl(pred_depth, gt_depth, key=k_sample, select=True)
    out_all = vnl(pred_depth, gt_depth, key=k_sample, select=False)
    jax.block_until_ready((out_sel, out_all))

    # Self-check: the sort-free trimmed mean must match the sort-based form.
    loss3 = vnl._group_losses(pred_depth, gt_depth, key=k_sample)
    lf = loss3.reshape(-1)
    valid = lf >= 0.0
    if int(jnp.sum(valid)) > 0:
        fast = float(VNLLossPallas._trimmed_mean(lf, valid))
        ref = float(VNLLossPallas._trimmed_mean_sort(lf, valid))
        assert abs(fast - ref) <= 1e-5 + 1e-4 * abs(ref), (fast, ref)

    print("KERNEL_OK")
</pallas_src>

<mosaic_0001>
module attributes {stable_mosaic.version = 11 : i64} {
  func.func @_vnl_kernel(%arg0: i32, %arg1: memref<3x8x128xf32, #tpu.memory_space<vmem>>, %arg2: memref<3x8x128xf32, #tpu.memory_space<vmem>>, %arg3: memref<2x3x8x128xf32, #tpu.memory_space<vmem>>, %arg4: memref<2x3x8x128xf32, #tpu.memory_space<vmem>>, %arg5: memref<2x8x128xf32, #tpu.memory_space<vmem>>) attributes {dimension_semantics = [#tpu.dimension_semantics<parallel>], iteration_bounds = array<i64: 1>, scalar_prefetch = 0 : i64, scratch_operands = 0 : i64, tpu.core_type = #tpu.core_type<tc>, window_params = [{transform_indices = @transform_0, window_bounds = array<i64: 3, 8, 128>}, {transform_indices = @transform_1, window_bounds = array<i64: 3, 8, 128>}, {transform_indices = @transform_2, window_bounds = array<i64: 2, 3, 8, 128>}, {transform_indices = @transform_3, window_bounds = array<i64: 2, 3, 8, 128>}, {transform_indices = @transform_4, window_bounds = array<i64: 2, 8, 128>}]} {
    %c0 = arith.constant 0 : index
    %c0_0 = arith.constant 0 : index
    %c0_1 = arith.constant 0 : index
    %0 = vector.load %arg1[%c0, %c0_0, %c0_1] : memref<3x8x128xf32, #tpu.memory_space<vmem>>, vector<3x8x128xf32>
    %c0_2 = arith.constant 0 : index
    %c0_3 = arith.constant 0 : index
    %c0_4 = arith.constant 0 : index
    %1 = vector.load %arg2[%c0_2, %c0_3, %c0_4] : memref<3x8x128xf32, #tpu.memory_space<vmem>>, vector<3x8x128xf32>
    %c0_5 = arith.constant 0 : index
    %c0_6 = arith.constant 0 : index
    %c0_7 = arith.constant 0 : index
    %c0_8 = arith.constant 0 : index
    %2 = vector.load %arg3[%c0_5, %c0_6, %c0_7, %c0_8] : memref<2x3x8x128xf32, #tpu.memory_space<vmem>>, vector<2x3x8x128xf32>
    %c0_9 = arith.constant 0 : index
    %c0_10 = arith.constant 0 : index
    %c0_11 = arith.constant 0 : index
    %c0_12 = arith.constant 0 : index
    %3 = vector.load %arg4[%c0_9, %c0_10, %c0_11, %c0_12] : memref<2x3x8x128xf32, #tpu.memory_space<vmem>>, vector<2x3x8x128xf32>
    %4 = vector.extract_strided_slice %0 {offsets = [0, 0, 0], sizes = [1, 8, 128], strides = [1, 1, 1]} : vector<3x8x128xf32> to vector<1x8x128xf32>
    %5 = vector.shape_cast %4 : vector<1x8x128xf32> to vector<8x128xf32>
    %6 = vector.extract_strided_slice %1 {offsets = [0, 0, 0], sizes = [1, 8, 128], strides = [1, 1, 1]} : vector<3x8x128xf32> to vector<1x8x128xf32>
    %7 = vector.shape_cast %6 : vector<1x8x128xf32> to vector<8x128xf32>
    %8 = vector.extract_strided_slice %2 {offsets = [0, 0, 0, 0], sizes = [2, 1, 8, 128], strides = [1, 1, 1, 1]} : vector<2x3x8x128xf32> to vector<2x1x8x128xf32>
    %9 = vector.shape_cast %8 : vector<2x1x8x128xf32> to vector<2x8x128xf32>
    %10 = vector.extract_strided_slice %3 {offsets = [0, 0, 0, 0], sizes = [2, 1, 8, 128], strides = [1, 1, 1, 1]} : vector<2x3x8x128xf32> to vector<2x1x8x128xf32>
    %11 = vector.shape_cast %10 : vector<2x1x8x128xf32> to vector<2x8x128xf32>
    %12 = math.absf %9 : vector<2x8x128xf32>
    %13 = math.absf %11 : vector<2x8x128xf32>
    %14 = vector.shape_cast %5 : vector<8x128xf32> to vector<1x8x128xf32>
    %15 = vector.broadcast %14 : vector<1x8x128xf32> to vector<2x8x128xf32>
    %16 = arith.mulf %15, %12 : vector<2x8x128xf32>
    %17 = vector.shape_cast %7 : vector<8x128xf32> to vector<1x8x128xf32>
    %18 = vector.broadcast %17 : vector<1x8x128xf32> to vector<2x8x128xf32>
    %19 = arith.mulf %18, %12 : vector<2x8x128xf32>
    %20 = vector.shape_cast %5 : vector<8x128xf32> to vector<1x8x128xf32>
    %21 = vector.broadcast %20 : vector<1x8x128xf32> to vector<2x8x128xf32>
    %22 = arith.mulf %21, %13 : vector<2x8x128xf32>
    %23 = vector.shape_cast %7 : vector<8x128xf32> to vector<1x8x128xf32>
    %24 = vector.broadcast %23 : vector<1x8x128xf32> to vector<2x8x128xf32>
    %25 = arith.mulf %24, %13 : vector<2x8x128xf32>
    %26 = vector.extract_strided_slice %0 {offsets = [1, 0, 0], sizes = [1, 8, 128], strides = [1, 1, 1]} : vector<3x8x128xf32> to vector<1x8x128xf32>
    %27 = vector.shape_cast %26 : vector<1x8x128xf32> to vector<8x128xf32>
    %28 = vector.extract_strided_slice %1 {offsets = [1, 0, 0], sizes = [1, 8, 128], strides = [1, 1, 1]} : vector<3x8x128xf32> to vector<1x8x128xf32>
    %29 = vector.shape_cast %28 : vector<1x8x128xf32> to vector<8x128xf32>
    %30 = vector.extract_strided_slice %2 {offsets = [0, 1, 0, 0], sizes = [2, 1, 8, 128], strides = [1, 1, 1, 1]} : vector<2x3x8x128xf32> to vector<2x1x8x128xf32>
    %31 = vector.shape_cast %30 : vector<2x1x8x128xf32> to vector<2x8x128xf32>
    %32 = vector.extract_strided_slice %3 {offsets = [0, 1, 0, 0], sizes = [2, 1, 8, 128], strides = [1, 1, 1, 1]} : vector<2x3x8x128xf32> to vector<2x1x8x128xf32>
    %33 = vector.shape_cast %32 : vector<2x1x8x128xf32> to vector<2x8x128xf32>
    %34 = math.absf %31 : vector<2x8x128xf32>
    %35 = math.absf %33 : vector<2x8x128xf32>
    %36 = vector.shape_cast %27 : vector<8x128xf32> to vector<1x8x128xf32>
    %37 = vector.broadcast %36 : vector<1x8x128xf32> to vector<2x8x128xf32>
    %38 = arith.mulf %37, %34 : vector<2x8x128xf32>
    %39 = vector.shape_cast %29 : vector<8x128xf32> to vector<1x8x128xf32>
    %40 = vector.broadcast %39 : vector<1x8x128xf32> to vector<2x8x128xf32>
    %41 = arith.mulf %40, %34 : vector<2x8x128xf32>
    %42 = vector.shape_cast %27 : vector<8x128xf32> to vector<1x8x128xf32>
    %43 = vector.broadcast %42 : vector<1x8x128xf32> to vector<2x8x128xf32>
    %44 = arith.mulf %43, %35 : vector<2x8x128xf32>
    %45 = vector.shape_cast %29 : vector<8x128xf32> to vector<1x8x128xf32>
    %46 = vector.broadcast %45 : vector<1x8x128xf32> to vector<2x8x128xf32>
    %47 = arith.mulf %46, %35 : vector<2x8x128xf32>
    %48 = vector.extract_strided_slice %0 {offsets = [2, 0, 0], sizes = [1, 8, 128], strides = [1, 1, 1]} : vector<3x8x128xf32> to vector<1x8x128xf32>
    %49 = vector.shape_cast %48 : vector<1x8x128xf32> to vector<8x128xf32>
    %50 = vector.extract_strided_slice %1 {offsets = [2, 0, 0], sizes = [1, 8, 128], strides = [1, 1, 1]} : vector<3x8x128xf32> to vector<1x8x128xf32>
    %51 = vector.shape_cast %50 : vector<1x8x128xf32> to vector<8x128xf32>
    %52 = vector.extract_strided_slice %2 {offsets = [0, 2, 0, 0], sizes = [2, 1, 8, 128], strides = [1, 1, 1, 1]} : vector<2x3x8x128xf32> to vector<2x1x8x128xf32>
    %53 = vector.shape_cast %52 : vector<2x1x8x128xf32> to vector<2x8x128xf32>
    %54 = vector.extract_strided_slice %3 {offsets = [0, 2, 0, 0], sizes = [2, 1, 8, 128], strides = [1, 1, 1, 1]} : vector<2x3x8x128xf32> to vector<2x1x8x128xf32>
    %55 = vector.shape_cast %54 : vector<2x1x8x128xf32> to vector<2x8x128xf32>
    %56 = math.absf %53 : vector<2x8x128xf32>
    %57 = math.absf %55 : vector<2x8x128xf32>
    %58 = vector.shape_cast %49 : vector<8x128xf32> to vector<1x8x128xf32>
    %59 = vector.broadcast %58 : vector<1x8x128xf32> to vector<2x8x128xf32>
    %60 = arith.mulf %59, %56 : vector<2x8x128xf32>
    %61 = vector.shape_cast %51 : vector<8x128xf32> to vector<1x8x128xf32>
    %62 = vector.broadcast %61 : vector<1x8x128xf32> to vector<2x8x128xf32>
    %63 = arith.mulf %62, %56 : vector<2x8x128xf32>
    %64 = vector.shape_cast %49 : vector<8x128xf32> to vector<1x8x128xf32>
    %65 = vector.broadcast %64 : vector<1x8x128xf32> to vector<2x8x128xf32>
    %66 = arith.mulf %65, %57 : vector<2x8x128xf32>
    %67 = vector.shape_cast %51 : vector<8x128xf32> to vector<1x8x128xf32>
    %68 = vector.broadcast %67 : vector<1x8x128xf32> to vector<2x8x128xf32>
    %69 = arith.mulf %68, %57 : vector<2x8x128xf32>
    %70 = arith.subf %38, %16 : vector<2x8x128xf32>
    %71 = arith.subf %60, %16 : vector<2x8x128xf32>
    %72 = arith.subf %60, %38 : vector<2x8x128xf32>
    %73 = arith.subf %41, %19 : vector<2x8x128xf32>
    %74 = arith.subf %63, %19 : vector<2x8x128xf32>
    %75 = arith.subf %63, %41 : vector<2x8x128xf32>
    %76 = arith.subf %31, %9 : vector<2x8x128xf32>
    %77 = arith.subf %53, %9 : vector<2x8x128xf32>
    %78 = arith.subf %53, %31 : vector<2x8x128xf32>
    %79 = arith.mulf %70, %70 : vector<2x8x128xf32>
    %80 = arith.mulf %71, %71 : vector<2x8x128xf32>
    %81 = arith.mulf %72, %72 : vector<2x8x128xf32>
    %82 = arith.mulf %73, %73 : vector<2x8x128xf32>
    %83 = arith.mulf %74, %74 : vector<2x8x128xf32>
    %84 = arith.mulf %75, %75 : vector<2x8x128xf32>
    %85 = arith.mulf %76, %76 : vector<2x8x128xf32>
    %86 = arith.mulf %77, %77 : vector<2x8x128xf32>
    %87 = arith.mulf %78, %78 : vector<2x8x128xf32>
    %88 = arith.addf %79, %82 : vector<2x8x128xf32>
    %89 = arith.addf %88, %85 : vector<2x8x128xf32>
    %90 = arith.addf %80, %83 : vector<2x8x128xf32>
    %91 = arith.addf %90, %86 : vector<2x8x128xf32>
    %92 = arith.addf %81, %84 : vector<2x8x128xf32>
    %93 = arith.addf %92, %87 : vector<2x8x128xf32>
    %94 = arith.mulf %70, %71 : vector<2x8x128xf32>
    %95 = arith.mulf %73, %74 : vector<2x8x128xf32>
    %96 = arith.addf %94, %95 : vector<2x8x128xf32>
    %97 = arith.mulf %76, %77 : vector<2x8x128xf32>
    %98 = arith.addf %96, %97 : vector<2x8x128xf32>
    %99 = arith.mulf %98, %98 : vector<2x8x128xf32>
    %100 = arith.mulf %89, %91 : vector<2x8x128xf32>
    %cst = arith.constant 7.516890e-01 : f32
    %101 = vector.broadcast %cst : f32 to vector<2x8x128xf32>
    %102 = arith.mulf %101, %100 : vector<2x8x128xf32>
    %103 = arith.cmpf ogt, %99, %102 : vector<2x8x128xf32>
    %104 = arith.mulf %70, %72 : vector<2x8x128xf32>
    %105 = arith.mulf %73, %75 : vector<2x8x128xf32>
    %106 = arith.addf %104, %105 : vector<2x8x128xf32>
    %107 = arith.mulf %76, %78 : vector<2x8x128xf32>
    %108 = arith.addf %106, %107 : vector<2x8x128xf32>
    %109 = arith.mulf %108, %108 : vector<2x8x128xf32>
    %110 = arith.mulf %89, %93 : vector<2x8x128xf32>
    %cst_13 = arith.constant 7.516890e-01 : f32
    %111 = vector.broadcast %cst_13 : f32 to vector<2x8x128xf32>
    %112 = arith.mulf %111, %110 : vector<2x8x128xf32>
    %113 = arith.cmpf ogt, %109, %112 : vector<2x8x128xf32>
    %114 = arith.ori %103, %113 : vector<2x8x128xi1>
    %115 = arith.mulf %71, %72 : vector<2x8x128xf32>
    %116 = arith.mulf %74, %75 : vector<2x8x128xf32>
    %117 = arith.addf %115, %116 : vector<2x8x128xf32>
    %118 = arith.mulf %77, %78 : vector<2x8x128xf32>
    %119 = arith.addf %117, %118 : vector<2x8x128xf32>
    %120 = arith.mulf %119, %119 : vector<2x8x128xf32>
    %121 = arith.mulf %91, %93 : vector<2x8x128xf32>
    %cst_14 = arith.constant 7.516890e-01 : f32
    %122 = vector.broadcast %cst_14 : f32 to vector<2x8x128xf32>
    %123 = arith.mulf %122, %121 : vector<2x8x128xf32>
    %124 = arith.cmpf ogt, %120, %123 : vector<2x8x128xf32>
    %125 = arith.ori %114, %124 : vector<2x8x128xi1>
    %cst_15 = arith.constant 9.99999974E-5 : f32
    %126 = vector.broadcast %cst_15 : f32 to vector<2x8x128xf32>
    %127 = arith.cmpf ogt, %9, %126 : vector<2x8x128xf32>
    %cst_16 = arith.constant 9.99999974E-5 : f32
    %128 = vector.broadcast %cst_16 : f32 to vector<2x8x128xf32>
    %129 = arith.cmpf ogt, %31, %128 : vector<2x8x128xf32>
    %130 = arith.andi %127, %129 : vector<2x8x128xi1>
    %cst_17 = arith.constant 9.99999974E-5 : f32
    %131 = vector.broadcast %cst_17 : f32 to vector<2x8x128xf32>
    %132 = arith.cmpf ogt, %53, %131 : vector<2x8x128xf32>
    %133 = arith.andi %130, %132 : vector<2x8x128xi1>
    %cst_18 = arith.constant 2.500000e-05 : f32
    %134 = vector.broadcast %cst_18 : f32 to vector<2x8x128xf32>
    %135 = arith.cmpf olt, %79, %134 : vector<2x8x128xf32>
    %cst_19 = arith.constant 2.500000e-05 : f32
    %136 = vector.broadcast %cst_19 : f32 to vector<2x8x128xf32>
    %137 = arith.cmpf olt, %80, %136 : vector<2x8x128xf32>
    %138 = arith.ori %135, %137 : vector<2x8x128xi1>
    %cst_20 = arith.constant 2.500000e-05 : f32
    %139 = vector.broadcast %cst_20 : f32 to vector<2x8x128xf32>
    %140 = arith.cmpf olt, %81, %139 : vector<2x8x128xf32>
    %141 = arith.ori %138, %140 : vector<2x8x128xi1>
    %cst_21 = arith.constant 2.500000e-05 : f32
    %142 = vector.broadcast %cst_21 : f32 to vector<2x8x128xf32>
    %143 = arith.cmpf olt, %82, %142 : vector<2x8x128xf32>
    %cst_22 = arith.constant 2.500000e-05 : f32
    %144 = vector.broadcast %cst_22 : f32 to vector<2x8x128xf32>
    %145 = arith.cmpf olt, %83, %144 : vector<2x8x128xf32>
    %146 = arith.ori %143, %145 : vector<2x8x128xi1>
    %cst_23 = arith.constant 2.500000e-05 : f32
    %147 = vector.broadcast %cst_23 : f32 to vector<2x8x128xf32>
    %148 = arith.cmpf olt, %84, %147 : vector<2x8x128xf32>
    %149 = arith.ori %146, %148 : vector<2x8x128xi1>
    %cst_24 = arith.constant 2.500000e-05 : f32
    %150 = vector.broadcast %cst_24 : f32 to vector<2x8x128xf32>
    %151 = arith.cmpf olt, %85, %150 : vector<2x8x128xf32>
    %cst_25 = arith.constant 2.500000e-05 : f32
    %152 = vector.broadcast %cst_25 : f32 to vector<2x8x128xf32>
    %153 = arith.cmpf olt, %86, %152 : vector<2x8x128xf32>
    %154 = arith.ori %151, %153 : vector<2x8x128xi1>
    %cst_26 = arith.constant 2.500000e-05 : f32
    %155 = vector.broadcast %cst_26 : f32 to vector<2x8x128xf32>
    %156 = arith.cmpf olt, %87, %155 : vector<2x8x128xf32>
    %157 = arith.ori %154, %156 : vector<2x8x128xi1>
    %158 = arith.andi %141, %149 : vector<2x8x128xi1>
    %159 = arith.andi %158, %157 : vector<2x8x128xi1>
    %160 = arith.ori %159, %125 : vector<2x8x128xi1>
    %cst_27 = arith.constant dense<true> : vector<2x8x128xi1>
    %161 = arith.xori %160, %cst_27 : vector<2x8x128xi1>
    %162 = arith.andi %133, %161 : vector<2x8x128xi1>
    %cst_28 = arith.constant 0.000000e+00 : f32
    %163 = vector.broadcast %cst_28 : f32 to vector<2x8x128xf32>
    %164 = arith.cmpf oeq, %11, %163 : vector<2x8x128xf32>
    %cst_29 = arith.constant 0.000000e+00 : f32
    %165 = vector.broadcast %cst_29 : f32 to vector<2x8x128xf32>
    %166 = arith.cmpf oeq, %33, %165 : vector<2x8x128xf32>
    %cst_30 = arith.constant 0.000000e+00 : f32
    %167 = vector.broadcast %cst_30 : f32 to vector<2x8x128xf32>
    %168 = arith.cmpf oeq, %55, %167 : vector<2x8x128xf32>
    %cst_31 = arith.constant 9.99999974E-5 : f32
    %169 = vector.broadcast %cst_31 : f32 to vector<2x8x128xf32>
    %170 = arith.select %164, %169, %22 : vector<2x8x128xi1>, vector<2x8x128xf32>
    %cst_32 = arith.constant 9.99999974E-5 : f32
    %171 = vector.broadcast %cst_32 : f32 to vector<2x8x128xf32>
    %172 = arith.select %164, %171, %44 : vector<2x8x128xi1>, vector<2x8x128xf32>
    %cst_33 = arith.constant 9.99999974E-5 : f32
    %173 = vector.broadcast %cst_33 : f32 to vector<2x8x128xf32>
    %174 = arith.select %164, %173, %66 : vector<2x8x128xi1>, vector<2x8x128xf32>
    %cst_34 = arith.constant 9.99999974E-5 : f32
    %175 = vector.broadcast %cst_34 : f32 to vector<2x8x128xf32>
    %176 = arith.select %166, %175, %25 : vector<2x8x128xi1>, vector<2x8x128xf32>
    %cst_35 = arith.constant 9.99999974E-5 : f32
    %177 = vector.broadcast %cst_35 : f32 to vector<2x8x128xf32>
    %178 = arith.select %166, %177, %47 : vector<2x8x128xi1>, vector<2x8x128xf32>
    %cst_36 = arith.constant 9.99999974E-5 : f32
    %179 = vector.broadcast %cst_36 : f32 to vector<2x8x128xf32>
    %180 = arith.select %166, %179, %69 : vector<2x8x128xi1>, vector<2x8x128xf32>
    %cst_37 = arith.constant 9.99999974E-5 : f32
    %181 = vector.broadcast %cst_37 : f32 to vector<2x8x128xf32>
    %182 = arith.select %168, %181, %11 : vector<2x8x128xi1>, vector<2x8x128xf32>
    %cst_38 = arith.constant 9.99999974E-5 : f32
    %183 = vector.broadcast %cst_38 : f32 to vector<2x8x128xf32>
    %184 = arith.select %168, %183, %33 : vector<2x8x128xi1>, vector<2x8x128xf32>
    %cst_39 = arith.constant 9.99999974E-5 : f32
    %185 = vector.broadcast %cst_39 : f32 to vector<2x8x128xf32>
    %186 = arith.select %168, %185, %55 : vector<2x8x128xi1>, vector<2x8x128xf32>
    %187 = arith.mulf %73, %77 : vector<2x8x128xf32>
    %188 = arith.mulf %76, %74 : vector<2x8x128xf32>
    %189 = arith.subf %187, %188 : vector<2x8x128xf32>
    %190 = arith.mulf %76, %71 : vector<2x8x128xf32>
    %191 = arith.mulf %70, %77 : vector<2x8x128xf32>
    %192 = arith.subf %190, %191 : vector<2x8x128xf32>
    %193 = arith.mulf %70, %74 : vector<2x8x128xf32>
    %194 = arith.mulf %73, %71 : vector<2x8x128xf32>
    %195 = arith.subf %193, %194 : vector<2x8x128xf32>
    %196 = arith.subf %172, %170 : vector<2x8x128xf32>
    %197 = arith.subf %178, %176 : vector<2x8x128xf32>
    %198 = arith.subf %184, %182 : vector<2x8x128xf32>
    %199 = arith.subf %174, %170 : vector<2x8x128xf32>
    %200 = arith.subf %180, %176 : vector<2x8x128xf32>
    %201 = arith.subf %186, %182 : vector<2x8x128xf32>
    %202 = arith.mulf %197, %201 : vector<2x8x128xf32>
    %203 = arith.mulf %198, %200 : vector<2x8x128xf32>
    %204 = arith.subf %202, %203 : vector<2x8x128xf32>
    %205 = arith.mulf %198, %199 : vector<2x8x128xf32>
    %206 = arith.mulf %196, %201 : vector<2x8x128xf32>
    %207 = arith.subf %205, %206 : vector<2x8x128xf32>
    %208 = arith.mulf %196, %200 : vector<2x8x128xf32>
    %209 = arith.mulf %197, %199 : vector<2x8x128xf32>
    %210 = arith.subf %208, %209 : vector<2x8x128xf32>
    %211 = arith.mulf %189, %189 : vector<2x8x128xf32>
    %212 = arith.mulf %192, %192 : vector<2x8x128xf32>
    %213 = arith.addf %211, %212 : vector<2x8x128xf32>
    %214 = arith.mulf %195, %195 : vector<2x8x128xf32>
    %215 = arith.addf %213, %214 : vector<2x8x128xf32>
    %216 = arith.mulf %204, %204 : vector<2x8x128xf32>
    %217 = arith.mulf %207, %207 : vector<2x8x128xf32>
    %218 = arith.addf %216, %217 : vector<2x8x128xf32>
    %219 = arith.mulf %210, %210 : vector<2x8x128xf32>
    %220 = arith.addf %218, %219 : vector<2x8x128xf32>
    %cst_40 = arith.constant 0.000000e+00 : f32
    %221 = vector.broadcast %cst_40 : f32 to vector<2x8x128xf32>
    %222 = arith.cmpf oeq, %215, %221 : vector<2x8x128xf32>
    %223 = math.rsqrt %215 : vector<2x8x128xf32>
    %cst_41 = arith.constant 1.000000e+02 : f32
    %224 = vector.broadcast %cst_41 : f32 to vector<2x8x128xf32>
    %225 = arith.select %222, %224, %223 : vector<2x8x128xi1>, vector<2x8x128xf32>
    %cst_42 = arith.constant 0.000000e+00 : f32
    %226 = vector.broadcast %cst_42 : f32 to vector<2x8x128xf32>
    %227 = arith.cmpf oeq, %220, %226 : vector<2x8x128xf32>
    %228 = math.rsqrt %220 : vector<2x8x128xf32>
    %cst_43 = arith.constant 1.000000e+02 : f32
    %229 = vector.broadcast %cst_43 : f32 to vector<2x8x128xf32>
    %230 = arith.select %227, %229, %228 : vector<2x8x128xi1>, vector<2x8x128xf32>
    %231 = arith.mulf %189, %225 : vector<2x8x128xf32>
    %232 = arith.mulf %204, %230 : vector<2x8x128xf32>
    %233 = arith.subf %231, %232 : vector<2x8x128xf32>
    %234 = math.absf %233 : vector<2x8x128xf32>
    %235 = arith.mulf %192, %225 : vector<2x8x128xf32>
    %236 = arith.mulf %207, %230 : vector<2x8x128xf32>
    %237 = arith.subf %235, %236 : vector<2x8x128xf32>
    %238 = math.absf %237 : vector<2x8x128xf32>
    %239 = arith.addf %234, %238 : vector<2x8x128xf32>
    %240 = arith.mulf %195, %225 : vector<2x8x128xf32>
    %241 = arith.mulf %210, %230 : vector<2x8x128xf32>
    %242 = arith.subf %240, %241 : vector<2x8x128xf32>
    %243 = math.absf %242 : vector<2x8x128xf32>
    %244 = arith.addf %239, %243 : vector<2x8x128xf32>
    %cst_44 = arith.constant -1.000000e+00 : f32
    %245 = vector.broadcast %cst_44 : f32 to vector<2x8x128xf32>
    %246 = arith.select %162, %244, %245 : vector<2x8x128xi1>, vector<2x8x128xf32>
    %c0_45 = arith.constant 0 : index
    %c0_46 = arith.constant 0 : index
    %c0_47 = arith.constant 0 : index
    %247 = vector.load %arg5[%c0_45, %c0_46, %c0_47] : memref<2x8x128xf32, #tpu.memory_space<vmem>>, vector<2x8x128xf32>
    tpu.vector_store %arg5[%c0_45, %c0_46, %c0_47], %246 {strides = array<i32>} : memref<2x8x128xf32, #tpu.memory_space<vmem>>, vector<2x8x128xf32>,
    return
  }
  func.func @transform_0(%arg0: i32) -> (i32, i32, i32) {
    %c0_i32 = arith.constant 0 : i32
    %c0_i32_0 = arith.constant 0 : i32
    %c0_i32_1 = arith.constant 0 : i32
    return %c0_i32, %arg0, %c0_i32_0 : i32, i32, i32
  }
  func.func @transform_1(%arg0: i32) -> (i32, i32, i32) {
    %c0_i32 = arith.constant 0 : i32
    %c0_i32_0 = arith.constant 0 : i32
    %c0_i32_1 = arith.constant 0 : i32
    return %c0_i32, %arg0, %c0_i32_0 : i32, i32, i32
  }
  func.func @transform_2(%arg0: i32) -> (i32, i32, i32, i32) {
    %c0_i32 = arith.constant 0 : i32
    %c0_i32_0 = arith.constant 0 : i32
    %c0_i32_1 = arith.constant 0 : i32
    %c0_i32_2 = arith.constant 0 : i32
    return %c0_i32, %c0_i32_0, %arg0, %c0_i32_1 : i32, i32, i32, i32
  }
  func.func @transform_3(%arg0: i32) -> (i32, i32, i32, i32) {
    %c0_i32 = arith.constant 0 : i32
    %c0_i32_0 = arith.constant 0 : i32
    %c0_i32_1 = arith.constant 0 : i32
    %c0_i32_2 = arith.constant 0 : i32
    return %c0_i32, %c0_i32_0, %arg0, %c0_i32_1 : i32, i32, i32, i32
  }
  func.func @transform_4(%arg0: i32) -> (i32, i32, i32) {
    %c0_i32 = arith.constant 0 : i32
    %c0_i32_0 = arith.constant 0 : i32
    %c0_i32_1 = arith.constant 0 : i32
    return %c0_i32, %arg0, %c0_i32_0 : i32, i32, i32
  }
}

</mosaic_0001>

<llo_original>
// kernel: tpu_custom_call.1
$region0: #{tpu_custom_call.1}
  #allocation0 [shape = 'u32[]', space=smem, size = 0x4, offset = 0x4, fixed_abs, tag = 'smem constant byte address 0x4 - core index']
  #allocation1 [shape = 'u32[144,128]{1,0:T(1,128)}', space=vmem, size = 0x12000, scoped, tag = 'internal scratch']
  %s0 = inlined_call_operand.hbm [shape: f32[3,8,128], index: 0, kind: input, shape index: {}]
  %s1 = inlined_call_operand.hbm [shape: f32[3,8,128], index: 1, kind: input, shape index: {}]
  %s2 = inlined_call_operand.hbm [shape: f32[2,3,8,128], index: 2, kind: input, shape index: {}]
  %s3 = inlined_call_operand.hbm [shape: f32[2,3,8,128], index: 3, kind: input, shape index: {}]
  %s4 = inlined_call_operand.hbm [shape: f32[2,8,128], index: 4, kind: output, shape index: {}]
  %s5 = sld [smem:[#allocation0]]
  $region42: #{tpu_custom_call.1} parent=0
    _
  %s7 = ssub.s32 1, %s5
  %s8 = scalar_select 0, %s7, %s5
  $region1: #{tpu_custom_call.1} parent=0
    #allocation2 [shape = 'u8[12288]{0}', space=vmem, size = 0x3000, scoped, tag = 'input window, operand 0, single buffered']
    #allocation3 [shape = 's32[1]{0}', space=sflag, size = 0x4, scoped, tag = 'scoped memory for tpu_custom_call.1']
    #allocation4 [shape = 's32[1]{0}', space=sflag, size = 0x4, scoped, tag = 'scoped memory for tpu_custom_call.1']
    #allocation5 [shape = 'u8[12288]{0}', space=vmem, size = 0x3000, scoped, tag = 'input window, operand 1, single buffered']
    #allocation6 [shape = 's32[1]{0}', space=sflag, size = 0x4, scoped, tag = 'scoped memory for tpu_custom_call.1']
    #allocation7 [shape = 'u8[24576]{0}', space=vmem, size = 0x6000, scoped, tag = 'input window, operand 2, single buffered']
    #allocation8 [shape = 'u8[24576]{0}', space=vmem, size = 0x6000, scoped, tag = 'input window, operand 3, single buffered']
    #allocation9 [shape = 's32[1]{0}', space=sflag, size = 0x4, scoped, tag = 'scoped memory for tpu_custom_call.1']
    #allocation10 [shape = 'u8[8192]{0}', space=vmem, size = 0x2000, scoped, tag = 'output window, operand 0, single buffered']
    %9 = vsyncpa [#allocation3], 0
    %10 = vsyncpa [#allocation6], 0
    %11 = vsyncpa [#allocation9], 0
    %12 = vsyncpa [#allocation4], 0
    // Predicated region
    $region2: #{tpu_custom_call.1} parent=1 // pred_check
      _
    $region3: #{tpu_custom_call.1} parent=1 // pred_check_branch
      %14 = sbr.rel (0) target = $region5
    $region4: #{tpu_custom_call.1} parent=1 // pred_region
      %s16 = ssub.s32 384, 384
      %17 = vsyncadd [#allocation3], %s16
      %s18 = sshll.u32 [#allocation2], 4
      %s19 = int_to_ptr.vmem [resolvable:$true] %s18
      %24 = dma.hbm_to_vmem [thread:$0]  %s0, 384, %s19, [#allocation3], 128, 128, 8
    $region5: #{tpu_custom_call.1} parent=1 // pred_fallthru
      _
    // Predicated region
    $region6: #{tpu_custom_call.1} parent=1 // pred_check
      _
    $region7: #{tpu_custom_call.1} parent=1 // pred_check_branch
      %26 = sbr.rel (0) target = $region9
    $region8: #{tpu_custom_call.1} parent=1 // pred_region
      %s28 = ssub.s32 384, 384
      %29 = vsyncadd [#allocation6], %s28
      %s30 = sshll.u32 [#allocation5], 4
      %s31 = int_to_ptr.vmem [resolvable:$true] %s30
      %36 = dma.hbm_to_vmem [thread:$0]  %s1, 384, %s31, [#allocation6], 128, 128, 8
    $region9: #{tpu_custom_call.1} parent=1 // pred_fallthru
      _
    // Predicated region
    $region10: #{tpu_custom_call.1} parent=1 // pred_check
      _
    $region11: #{tpu_custom_call.1} parent=1 // pred_check_branch
      %38 = sbr.rel (0) target = $region13
    $region12: #{tpu_custom_call.1} parent=1 // pred_region
      %s40 = ssub.s32 768, 768
      %41 = vsyncadd [#allocation6], %s40
      %s42 = sshll.u32 [#allocation7], 4
      %s43 = int_to_ptr.vmem [resolvable:$true] %s42
      %48 = dma.hbm_to_vmem [thread:$0]  %s2, 768, %s43, [#allocation6], 128, 128, 8
    $region13: #{tpu_custom_call.1} parent=1 // pred_fallthru
      _
    // Predicated region
    $region14: #{tpu_custom_call.1} parent=1 // pred_check
      _
    $region15: #{tpu_custom_call.1} parent=1 // pred_check_branch
      %50 = sbr.rel (0) target = $region17
    $region16: #{tpu_custom_call.1} parent=1 // pred_region
      %s52 = ssub.s32 768, 768
      %53 = vsyncadd [#allocation9], %s52
      %s54 = sshll.u32 [#allocation8], 4
      %s55 = int_to_ptr.vmem [resolvable:$true] %s54
      %60 = dma.hbm_to_vmem [thread:$0]  %s3, 768, %s55, [#allocation9], 128, 128, 8
    $region17: #{tpu_custom_call.1} parent=1 // pred_fallthru
      _
    // Predicated region
    $region18: #{tpu_custom_call.1} parent=1 // pred_check
      _
    $region19: #{tpu_custom_call.1} parent=1 // pred_check_branch
      %62 = sbr.rel (0) target = $region21
    $region20: #{tpu_custom_call.1} parent=1 // pred_region
      %63 = dma.done [#allocation3], 384
    $region21: #{tpu_custom_call.1} parent=1 // pred_fallthru
      _
    // Predicated region
    $region22: #{tpu_custom_call.1} parent=1 // pred_check
      _
    $region23: #{tpu_custom_call.1} parent=1 // pred_check_branch
      %65 = sbr.rel (0) target = $region25
    $region24: #{tpu_custom_call.1} parent=1 // pred_region
      %66 = dma.done [#allocation6], 384
    $region25: #{tpu_custom_call.1} parent=1 // pred_fallthru
      _
    // Predicated region
    $region26: #{tpu_custom_call.1} parent=1 // pred_check
      _
    $region27: #{tpu_custom_call.1} parent=1 // pred_check_branch
      %68 = sbr.rel (0) target = $region29
    $region28: #{tpu_custom_call.1} parent=1 // pred_region
      %69 = dma.done [#allocation6], 768
    $region29: #{tpu_custom_call.1} parent=1 // pred_fallthru
      _
    // Predicated region
    $region30: #{tpu_custom_call.1} parent=1 // pred_check
      _
    $region31: #{tpu_custom_call.1} parent=1 // pred_check_branch
      %71 = sbr.rel (0) target = $region33
    $region32: #{tpu_custom_call.1} parent=1 // pred_region
      %72 = dma.done [#allocation9], 768
    $region33: #{tpu_custom_call.1} parent=1 // pred_fallthru
      _
    %v73 = vld [vmem:[#allocation2] sm:$0xff]
    %v74 = vld [vmem:[#allocation2 + $0x8] sm:$0xff]
    %v75 = vld [vmem:[#allocation2 + $0x10] sm:$0xff]
    %v76 = vld [vmem:[#allocation5] sm:$0xff]
    %v77 = vld [vmem:[#allocation5 + $0x8] sm:$0xff]
    %v78 = vld [vmem:[#allocation5 + $0x10] sm:$0xff]
    %v79 = vld [vmem:[#allocation7] sm:$0xff]
    %v80 = vld [vmem:[#allocation7 + $0x8] sm:$0xff]
    %v81 = vld [vmem:[#allocation7 + $0x10] sm:$0xff]
    %v82 = vld [vmem:[#allocation7 + $0x18] sm:$0xff]
    %v83 = vld [vmem:[#allocation7 + $0x20] sm:$0xff]
    %v84 = vld [vmem:[#allocation7 + $0x28] sm:$0xff]
    %v85 = vld [vmem:[#allocation8] sm:$0xff]
    %v86 = vld [vmem:[#allocation8 + $0x8] sm:$0xff]
    %v87 = vld [vmem:[#allocation8 + $0x10] sm:$0xff]
    %v88 = vld [vmem:[#allocation8 + $0x18] sm:$0xff]
    %v89 = vld [vmem:[#allocation8 + $0x20] sm:$0xff]
    %v90 = vld [vmem:[#allocation8 + $0x28] sm:$0xff]
    %v91 = vand.u32 2147483647, %v79
    %v92 = vand.u32 2147483647, %v82
    %v93 = vand.u32 2147483647, %v85
    %v94 = vand.u32 2147483647, %v88
    %v95 = vmul.f32 %v73, %v91
    %v96 = vmul.f32 %v73, %v92
    %v97 = vmul.f32 %v76, %v91
    %v98 = vmul.f32 %v76, %v92
    %v99 = vmul.f32 %v73, %v93
    %v100 = vmul.f32 %v73, %v94
    %v101 = vmul.f32 %v76, %v93
    %v102 = vmul.f32 %v76, %v94
    %v103 = vand.u32 2147483647, %v80
    %v104 = vand.u32 2147483647, %v83
    %v105 = vand.u32 2147483647, %v86
    %v106 = vand.u32 2147483647, %v89
    %v107 = vmul.f32 %v74, %v103
    %v108 = vmul.f32 %v74, %v104
    %v109 = vmul.f32 %v77, %v103
    %v110 = vmul.f32 %v77, %v104
    %v111 = vmul.f32 %v74, %v105
    %v112 = vmul.f32 %v74, %v106
    %v113 = vmul.f32 %v77, %v105
    %v114 = vmul.f32 %v77, %v106
    %v115 = vand.u32 2147483647, %v81
    %v116 = vand.u32 2147483647, %v84
    %v117 = vand.u32 2147483647, %v87
    %v118 = vand.u32 2147483647, %v90
    %v119 = vmul.f32 %v75, %v115
    %v120 = vmul.f32 %v75, %v116
    %v121 = vmul.f32 %v78, %v115
    %v122 = vmul.f32 %v78, %v116
    %v123 = vmul.f32 %v75, %v117
    %v124 = vmul.f32 %v75, %v118
    %v125 = vmul.f32 %v78, %v117
    %v126 = vmul.f32 %v78, %v118
    %v127 = vsub.f32 %v107, %v95
    %v128 = vsub.f32 %v108, %v96
    %v129 = vsub.f32 %v119, %v95
    %v130 = vsub.f32 %v120, %v96
    %v131 = vsub.f32 %v119, %v107
    %v132 = vsub.f32 %v120, %v108
    %v133 = vsub.f32 %v109, %v97
    %v134 = vsub.f32 %v110, %v98
    %v135 = vsub.f32 %v121, %v97
    %v136 = vsub.f32 %v122, %v98
    %v137 = vsub.f32 %v121, %v109
    %v138 = vsub.f32 %v122, %v110
    %v139 = vsub.f32 %v80, %v79
    %v140 = vsub.f32 %v83, %v82
    %v141 = vsub.f32 %v81, %v79
    %v142 = vsub.f32 %v84, %v82
    %v143 = vsub.f32 %v81, %v80
    %v144 = vsub.f32 %v84, %v83
    %v145 = vmul.f32 %v127, %v127
    %v146 = vmul.f32 %v128, %v128
    %v147 = vmul.f32 %v129, %v129
    %v148 = vmul.f32 %v130, %v130
    %v149 = vmul.f32 %v131, %v131
    %v150 = vmul.f32 %v132, %v132
    %v151 = vmul.f32 %v133, %v133
    %v152 = vmul.f32 %v134, %v134
    %v153 = vmul.f32 %v135, %v135
    %v154 = vmul.f32 %v136, %v136
    %v155 = vmul.f32 %v137, %v137
    %v156 = vmul.f32 %v138, %v138
    %v157 = vmul.f32 %v139, %v139
    %v158 = vmul.f32 %v140, %v140
    %v159 = vmul.f32 %v141, %v141
    %v160 = vmul.f32 %v142, %v142
    %v161 = vmul.f32 %v143, %v143
    %v162 = vmul.f32 %v144, %v144
    %v163 = vadd.f32 %v145, %v151
    %v164 = vadd.f32 %v146, %v152
    %v165 = vadd.f32 %v163, %v157
    %v166 = vadd.f32 %v164, %v158
    %v167 = vadd.f32 %v147, %v153
    %v168 = vadd.f32 %v148, %v154
    %v169 = vadd.f32 %v167, %v159
    %v170 = vadd.f32 %v168, %v160
    %v171 = vadd.f32 %v149, %v155
    %v172 = vadd.f32 %v150, %v156
    %v173 = vadd.f32 %v171, %v161
    %v174 = vadd.f32 %v172, %v162
    %v175 = vmul.f32 %v127, %v129
    %v176 = vmul.f32 %v128, %v130
    %v177 = vmul.f32 %v133, %v135
    %v178 = vmul.f32 %v134, %v136
    %v179 = vadd.f32 %v175, %v177
    %v180 = vadd.f32 %v176, %v178
    %v181 = vmul.f32 %v139, %v141
    %v182 = vmul.f32 %v140, %v142
    %v183 = vadd.f32 %v179, %v181
    %v184 = vadd.f32 %v180, %v182
    %v185 = vmul.f32 %v183, %v183
    %v186 = vmul.f32 %v184, %v184
    %v187 = vmul.f32 %v165, %v169
    %v188 = vmul.f32 %v166, %v170
    %v189 = vmul.f32 %v187, 0.751689
    %v190 = vmul.f32 %v188, 0.751689
    %vm191 = vcmp.gt.f32.partialorder %v185, %v189
    %vm192 = vcmp.gt.f32.partialorder %v186, %v190
    %v193 = vmul.f32 %v127, %v131
    %v194 = vmul.f32 %v128, %v132
    %v195 = vmul.f32 %v133, %v137
    %v196 = vmul.f32 %v134, %v138
    %v197 = vadd.f32 %v193, %v195
    %v198 = vadd.f32 %v194, %v196
    %v199 = vmul.f32 %v139, %v143
    %v200 = vmul.f32 %v140, %v144
    %v201 = vadd.f32 %v197, %v199
    %v202 = vadd.f32 %v198, %v200
    %v203 = vmul.f32 %v201, %v201
    %v204 = vmul.f32 %v202, %v202
    %v205 = vmul.f32 %v165, %v173
    %v206 = vmul.f32 %v166, %v174
    %v207 = vmul.f32 %v205, 0.751689
    %v208 = vmul.f32 %v206, 0.751689
    %vm209 = vcmp.gt.f32.partialorder %v203, %v207
    %vm210 = vcmp.gt.f32.partialorder %v204, %v208
    %vm211 = vmor %vm191, %vm209
    %vm212 = vmor %vm192, %vm210
    %v213 = vmul.f32 %v129, %v131
    %v214 = vmul.f32 %v130, %v132
    %v215 = vmul.f32 %v135, %v137
    %v216 = vmul.f32 %v136, %v138
    %v217 = vadd.f32 %v213, %v215
    %v218 = vadd.f32 %v214, %v216
    %v219 = vmul.f32 %v141, %v143
    %v220 = vmul.f32 %v142, %v144
    %v221 = vadd.f32 %v217, %v219
    %v222 = vadd.f32 %v218, %v220
    %v223 = vmul.f32 %v221, %v221
    %v224 = vmul.f32 %v222, %v222
    %v225 = vmul.f32 %v169, %v173
    %v226 = vmul.f32 %v170, %v174
    %v227 = vmul.f32 %v225, 0.751689
    %v228 = vmul.f32 %v226, 0.751689
    %vm229 = vcmp.gt.f32.partialorder %v223, %v227
    %vm230 = vcmp.gt.f32.partialorder %v224, %v228
    %vm231 = vmor %vm211, %vm229
    %vm232 = vmor %vm212, %vm230
    %vm233 = vcmp.gt.f32.partialorder %v79, 0.0001
    %vm234 = vcmp.gt.f32.partialorder %v82, 0.0001
    %vm235 = vcmp.gt.f32.partialorder %v80, 0.0001
    %vm236 = vcmp.gt.f32.partialorder %v83, 0.0001
    %vm237 = vmand %vm233, %vm235
    %vm238 = vmand %vm234, %vm236
    %vm239 = vcmp.gt.f32.partialorder %v81, 0.0001
    %vm240 = vcmp.gt.f32.partialorder %v84, 0.0001
    %vm241 = vmand %vm237, %vm239
    %vm242 = vmand %vm238, %vm240
    %vm243 = vcmp.lt.f32.partialorder %v145, 2.5e-05
    %vm244 = vcmp.lt.f32.partialorder %v146, 2.5e-05
    %vm245 = vcmp.lt.f32.partialorder %v147, 2.5e-05
    %vm246 = vcmp.lt.f32.partialorder %v148, 2.5e-05
    %vm247 = vmor %vm243, %vm245
    %vm248 = vmor %vm244, %vm246
    %vm249 = vcmp.lt.f32.partialorder %v149, 2.5e-05
    %vm250 = vcmp.lt.f32.partialorder %v150, 2.5e-05
    %vm251 = vmor %vm247, %vm249
    %vm252 = vmor %vm248, %vm250
    %vm253 = vcmp.lt.f32.partialorder %v151, 2.5e-05
    %vm254 = vcmp.lt.f32.partialorder %v152, 2.5e-05
    %vm255 = vcmp.lt.f32.partialorder %v153, 2.5e-05
    %vm256 = vcmp.lt.f32.partialorder %v154, 2.5e-05
    %vm257 = vmor %vm253, %vm255
    %vm258 = vmor %vm254, %vm256
    %vm259 = vcmp.lt.f32.partialorder %v155, 2.5e-05
    %vm260 = vcmp.lt.f32.partialorder %v156, 2.5e-05
    %vm261 = vmor %vm257, %vm259
    %vm262 = vmor %vm258, %vm260
    %vm263 = vcmp.lt.f32.partialorder %v157, 2.5e-05
    %vm264 = vcmp.lt.f32.partialorder %v158, 2.5e-05
    %vm265 = vcmp.lt.f32.partialorder %v159, 2.5e-05
    %vm266 = vcmp.lt.f32.partialorder %v160, 2.5e-05
    %vm267 = vmor %vm263, %vm265
    %vm268 = vmor %vm264, %vm266
    %vm269 = vcmp.lt.f32.partialorder %v161, 2.5e-05
    %vm270 = vcmp.lt.f32.partialorder %v162, 2.5e-05
    %vm271 = vmor %vm267, %vm269
    %vm272 = vmor %vm268, %vm270
    %vm273 = vmand %vm251, %vm261
    %vm274 = vmand %vm252, %vm262
    %vm275 = vmand %vm273, %vm271
    %vm276 = vmand %vm274, %vm272
    %vm277 = vmor %vm275, %vm231
    %vm278 = vmor %vm276, %vm232
    %vm279 = vmxor %vm277, 1
    %vm280 = vmxor %vm278, 1
    %vm281 = vmand %vm241, %vm279
    %vm282 = vmand %vm242, %vm280
    %vm283 = vcmp.eq.f32.partialorder %v85, 0.0
    %vm284 = vcmp.eq.f32.partialorder %v88, 0.0
    %vm285 = vcmp.eq.f32.partialorder %v86, 0.0
    %vm286 = vcmp.eq.f32.partialorder %v89, 0.0
    %vm287 = vcmp.eq.f32.partialorder %v87, 0.0
    %vm288 = vcmp.eq.f32.partialorder %v90, 0.0
    %v289 = vsel %vm283, 0.0001, %v99
    %v290 = vsel %vm284, 0.0001, %v100
    %v291 = vsel %vm283, 0.0001, %v111
    %v292 = vsel %vm284, 0.0001, %v112
    %v293 = vsel %vm283, 0.0001, %v123
    %v294 = vsel %vm284, 0.0001, %v124
    %v295 = vsel %vm285, 0.0001, %v101
    %v296 = vsel %vm286, 0.0001, %v102
    %v297 = vsel %vm285, 0.0001, %v113
    %v298 = vsel %vm286, 0.0001, %v114
    %v299 = vsel %vm285, 0.0001, %v125
    %v300 = vsel %vm286, 0.0001, %v126
    %v301 = vsel %vm287, 0.0001, %v85
    %v302 = vsel %vm288, 0.0001, %v88
    %v303 = vsel %vm287, 0.0001, %v86
    %v304 = vsel %vm288, 0.0001, %v89
    %v305 = vsel %vm287, 0.0001, %v87
    %v306 = vsel %vm288, 0.0001, %v90
    %v307 = vmul.f32 %v133, %v141
    %v308 = vmul.f32 %v134, %v142
    %v309 = vmul.f32 %v139, %v135
    %v310 = vmul.f32 %v140, %v136
    %v311 = vsub.f32 %v307, %v309
    %v312 = vsub.f32 %v308, %v310
    %v313 = vmul.f32 %v139, %v129
    %v314 = vmul.f32 %v140, %v130
    %v315 = vmul.f32 %v127, %v141
    %v316 = vmul.f32 %v128, %v142
    %v317 = vsub.f32 %v313, %v315
    %v318 = vsub.f32 %v314, %v316
    %v319 = vmul.f32 %v127, %v135
    %v320 = vmul.f32 %v128, %v136
    %v321 = vmul.f32 %v133, %v129
    %v322 = vmul.f32 %v134, %v130
    %v323 = vsub.f32 %v319, %v321
    %v324 = vsub.f32 %v320, %v322
    %v325 = vsub.f32 %v291, %v289
    %v326 = vsub.f32 %v292, %v290
    %v327 = vsub.f32 %v297, %v295
    %v328 = vsub.f32 %v298, %v296
    %v329 = vsub.f32 %v303, %v301
    %v330 = vsub.f32 %v304, %v302
    %v331 = vsub.f32 %v293, %v289
    %v332 = vsub.f32 %v294, %v290
    %v333 = vsub.f32 %v299, %v295
    %v334 = vsub.f32 %v300, %v296
    %v335 = vsub.f32 %v305, %v301
    %v336 = vsub.f32 %v306, %v302
    %v337 = vmul.f32 %v327, %v335
    %v338 = vmul.f32 %v328, %v336
    %v339 = vmul.f32 %v329, %v333
    %v340 = vmul.f32 %v330, %v334
    %v341 = vsub.f32 %v337, %v339
    %v342 = vsub.f32 %v338, %v340
    %v343 = vmul.f32 %v329, %v331
    %v344 = vmul.f32 %v330, %v332
    %v345 = vmul.f32 %v325, %v335
    %v346 = vmul.f32 %v326, %v336
    %v347 = vsub.f32 %v343, %v345
    %v348 = vsub.f32 %v344, %v346
    %v349 = vmul.f32 %v325, %v333
    %v350 = vmul.f32 %v326, %v334
    %v351 = vmul.f32 %v327, %v331
    %v352 = vmul.f32 %v328, %v332
    %v353 = vsub.f32 %v349, %v351
    %v354 = vsub.f32 %v350, %v352
    %v355 = vmul.f32 %v311, %v311
    %v356 = vmul.f32 %v312, %v312
    %v357 = vmul.f32 %v317, %v317
    %v358 = vmul.f32 %v318, %v318
    %v359 = vadd.f32 %v355, %v357
    %v360 = vadd.f32 %v356, %v358
    %v361 = vmul.f32 %v323, %v323
    %v362 = vmul.f32 %v324, %v324
    %v363 = vadd.f32 %v359, %v361
    %v364 = vadd.f32 %v360, %v362
    %v365 = vmul.f32 %v341, %v341
    %v366 = vmul.f32 %v342, %v342
    %v367 = vmul.f32 %v347, %v347
    %v368 = vmul.f32 %v348, %v348
    %v369 = vadd.f32 %v365, %v367
    %v370 = vadd.f32 %v366, %v368
    %v371 = vmul.f32 %v353, %v353
    %v372 = vmul.f32 %v354, %v354
    %v373 = vadd.f32 %v369, %v371
    %v374 = vadd.f32 %v370, %v372
    %vm375 = vcmp.eq.f32.partialorder %v363, 0.0
    %vm376 = vcmp.eq.f32.partialorder %v364, 0.0
    %v377 = vrsqrt.pop %v363
    %v378 = vrsqrt.pop %v364
    %v379 = vsel %vm375, 100.0, %v377
    %v380 = vsel %vm376, 100.0, %v378
    %vm381 = vcmp.eq.f32.partialorder %v373, 0.0
    %vm382 = vcmp.eq.f32.partialorder %v374, 0.0
    %v383 = vrsqrt.pop %v373
    %v384 = vrsqrt.pop %v374
    %v385 = vsel %vm381, 100.0, %v383
    %v386 = vsel %vm382, 100.0, %v384
    %v387 = vmul.f32 %v311, %v379
    %v388 = vmul.f32 %v312, %v380
    %v389 = vmul.f32 %v341, %v385
    %v390 = vmul.f32 %v342, %v386
    %v391 = vsub.f32 %v387, %v389
    %v392 = vsub.f32 %v388, %v390
    %v393 = vand.u32 2147483647, %v391
    %v394 = vand.u32 2147483647, %v392
    %v395 = vmul.f32 %v317, %v379
    %v396 = vmul.f32 %v318, %v380
    %v397 = vmul.f32 %v347, %v385
    %v398 = vmul.f32 %v348, %v386
    %v399 = vsub.f32 %v395, %v397
    %v400 = vsub.f32 %v396, %v398
    %v401 = vand.u32 2147483647, %v399
    %v402 = vand.u32 2147483647, %v400
    %v403 = vadd.f32 %v393, %v401
    %v404 = vadd.f32 %v394, %v402
    %v405 = vmul.f32 %v323, %v379
    %v406 = vmul.f32 %v324, %v380
    %v407 = vmul.f32 %v353, %v385
    %v408 = vmul.f32 %v354, %v386
    %v409 = vsub.f32 %v405, %v407
    %v410 = vsub.f32 %v406, %v408
    %v411 = vand.u32 2147483647, %v409
    %v412 = vand.u32 2147483647, %v410
    %v413 = vadd.f32 %v403, %v411
    %v414 = vadd.f32 %v404, %v412
    %v415 = vsel %vm281, %v413, -1.0
    %v416 = vsel %vm282, %v414, -1.0
    %417 = vst [vmem:[#allocation10] sm:$0xff] %v415
    %418 = vst [vmem:[#allocation10 + $0x8] sm:$0xff] %v416
    // Predicated region
    $region34: #{tpu_custom_call.1} parent=1 // pred_check
      _
    $region35: #{tpu_custom_call.1} parent=1 // pred_check_branch
      %420 = sbr.rel (0) target = $region37
    $region36: #{tpu_custom_call.1} parent=1 // pred_region
      %s422 = ssub.s32 256, 256
      %423 = vsyncadd [#allocation4], %s422
      %s424 = sshll.u32 [#allocation10], 4
      %s425 = int_to_ptr.vmem [resolvable:$true] %s424
      %430 = dma.vmem_to_hbm [thread:$0]  %s425, 256, %s4, [#allocation4], 128, 128, 8
    $region37: #{tpu_custom_call.1} parent=1 // pred_fallthru
      _
    // Predicated region
    $region38: #{tpu_custom_call.1} parent=1 // pred_check
      _
    $region39: #{tpu_custom_call.1} parent=1 // pred_check_branch
      %432 = sbr.rel (0) target = $region41
    $region40: #{tpu_custom_call.1} parent=1 // pred_region
      %433 = dma.done [#allocation4], 256
    $region41: #{tpu_custom_call.1} parent=1 // pred_fallthru
      _
    %434 = vsyncpa [#allocation3], 1
    %435 = vsyncpa [#allocation6], 1
    %436 = vsyncpa [#allocation9], 1
    %437 = vsyncpa [#allocation4], 1

</llo_original>
